<compile_context>
chip_gen: v5e
topology: v5e:2x2
jax: 0.10.0
libtpu: 0.0.40
codegen_flags: <defaults>
</compile_context>

<pallas_src>
import functools

import jax
import jax.numpy as jnp
from jax import lax
from jax.experimental import pallas as pl
from jax.experimental.pallas import tpu as pltpu


def _round_up(x, m):
    return -(-x // m) * m


def _pick_div_tile(total, align_unit, unit_bytes, budget_bytes):
    """Largest divisor d of `total` with (d*align_unit) % 8 == 0 (or d == total,
    i.e. the full extent, which is always a legal block dim) whose per-step
    working set d*unit_bytes fits the VMEM budget."""
    legal = [d for d in range(1, total + 1)
             if total % d == 0 and ((d * align_unit) % 8 == 0 or d == total)]
    fitting = [d for d in legal if d * unit_bytes <= budget_bytes]
    if fitting:
        return max(fitting)
    return min(legal)          # nothing fits the budget: smallest legal tile


# ----------------------------------------------------------------------------
# Pallas kernels
# ----------------------------------------------------------------------------
def _deconv_gemm_kernel(x_ref, w_ref, y_ref, stat_ref):
    """Polyphase transposed-conv row tile: one bf16 GEMM + BN-stat epilogue.

    x_ref   : (1, M, Kpad)     bf16   im2col'd input rows (M = tq*wq)
    w_ref   : (Kpad, Ceff)     bf16   polyphase GEMM weight (Ceff = s*s*Cout)
    y_ref   : (1, M, Ceff)     bf16   phase-major conv activation
    stat_ref: (1, 1, 2, Ceff)  f32    partial per-channel sum / sum-of-squares
    """
    r = jnp.dot(x_ref[0], w_ref[...], preferred_element_type=jnp.float32)
    rb = r.astype(jnp.bfloat16)
    y_ref[0] = rb

    # BN batch-stat partials from the *stored* (bf16-rounded) activation so
    # the second pass normalizes exactly what it reads back.
    rf = rb.astype(jnp.float32)
    s0 = jnp.sum(rf, axis=0, keepdims=True)
    s1 = jnp.sum(rf * rf, axis=0, keepdims=True)
    stat_ref[0, 0] = jnp.concatenate([s0, s1], axis=0)
    # NOTE: while this kernel is DMA-bound the XLU reduce + r*r epilogue is
    # free filler; if it ever becomes MXU-bound, fold sum-of-squares into the
    # GEMM (extra ones column) or a second tiny pass.


def _bn_act_nchw_kernel(y_ref, scale_ref, shift_ref, o_ref, *, relu):
    """Per-channel affine (BN normalize or conv bias) + ReLU, NCHW output.

    y_ref    : (1, th, Wout) bf16   one (batch, channel) row tile
    scale_ref: (1, 1,  Wout) f32    per-(batch*channel) scale, lane-dense row
    shift_ref: (1, 1,  Wout) f32
    o_ref    : (1, th, Wout) f32    final NCHW output tile
    """
    y = y_ref[0].astype(jnp.float32)
    out = y * scale_ref[0] + shift_ref[0]          # (1, Wout) row broadcast
    if relu:
        out = jnp.maximum(out, 0.0)
    o_ref[0] = out


# ----------------------------------------------------------------------------
# Wrapper: PyTorch-facing NCHW in / NCHW out
# ----------------------------------------------------------------------------
@functools.partial(jax.jit,
                   static_argnames=("stride", "relu", "bn", "vmem_budget_mb"))
def deconv2d_forward(x_nchw, weight_t, gamma, beta, bias=None, *,
                     stride, relu=True, bn=True, vmem_budget_mb=20):
    """Forward pass of Deconv2d.

    x_nchw  : (N, Cin, H, W)        float32
    weight_t: (Cin, Cout, k, k)     PyTorch ConvTranspose2d weight layout
    gamma, beta: (Cout,)            BatchNorm affine params (used when bn=True)
    bias    : (Cout,) or None       ConvTranspose2d bias (used when bn=False)
    returns : (N, Cout, Hout, Wout) NCHW float32 (stride==2 output is cropped
              to [:2H, :2W] exactly like the PyTorch module)
    """
    n, cin, h, w = x_nchw.shape
    cin2, cout, k, k2 = weight_t.shape
    assert cin == cin2 and k == k2
    assert stride in (1, 2)
    s = stride
    kp = -(-k // s)                     # taps per polyphase filter (ceil(k/s))
    ceff = s * s * cout                 # all output phases side by side
    budget = vmem_budget_mb * 1024 * 1024
    # NOTE: per-generation tuning -- on v5e/v6e (128 MiB VMEM) vmem_budget_mb
    # and vmem_limit_bytes can be raised to 64-96 MiB for bigger tiles; the
    # defaults here are sized to also fit v7x's 64 MiB VMEM.

    # ---- layout + dtype: NCHW -> NHWC, bf16 activations / weights -----------
    x = jnp.transpose(x_nchw, (0, 2, 3, 1)).astype(jnp.bfloat16)
    wt = weight_t.astype(jnp.bfloat16)

    # ---- polyphase GEMM weight: (kp*kp*Cin, s*s*Cout) ------------------------
    # wmat[(mp*kp+lp)*Cin + ci, (ph*s+pw)*Cout + co] = W[ci, co, kh, kw]
    # with kh = ph + s*(kp-1-mp), kw = pw + s*(kp-1-lp) (zero if tap >= k).
    row_blocks = []
    for mp in range(kp):
        for lp in range(kp):
            cols = []
            for ph in range(s):
                for pw in range(s):
                    kh = ph + s * (kp - 1 - mp)
                    kw = pw + s * (kp - 1 - lp)
                    if kh < k and kw < k:
                        cols.append(wt[:, :, kh, kw])
                    else:
                        cols.append(jnp.zeros((cin, cout), jnp.bfloat16))
            row_blocks.append(jnp.concatenate(cols, axis=1))
    wmat = jnp.concatenate(row_blocks, axis=0)            # (k0, ceff)
    k0 = kp * kp * cin
    # Lane-dense contraction only when the zero padding is cheap; padding a
    # tiny K (e.g. 16) up to 128 would multiply the input HBM stream by 8x.
    kpad = _round_up(k0, 128) if k0 >= 96 else _round_up(k0, 8)
    if kpad > k0:
        wmat = jnp.pad(wmat, ((0, kpad - k0), (0, 0)))

    # ---- phase-major output extents (stride==2 [:2H,:2W] crop is built in) --
    hq = h if s == 2 else h + k - 1
    wq = w if s == 2 else w + k - 1
    hout, wout = s * hq, s * wq

    # ---- wrapper-side im2col (plain XLA slice+concat; kernel = pure GEMM) ---
    pad_lo = kp - 1
    pad_hi = kp - 1 if s == 1 else 0
    x_pad = jnp.pad(x, ((0, 0), (pad_lo, pad_hi), (pad_lo, pad_hi), (0, 0)))
    taps = []
    for mp in range(kp):
        for lp in range(kp):
            taps.append(x_pad[:, mp:mp + hq, lp:lp + wq, :])
    x_cols = taps[0] if len(taps) == 1 else jnp.concatenate(taps, axis=-1)
    if kpad > k0:
        x_cols = jnp.pad(x_cols, ((0, 0), (0, 0), (0, 0), (0, kpad - k0)))
    x_cols = x_cols.reshape(n, hq * wq, kpad)             # (n, rows, K)

    # ---- conv row tiling: biggest M = tq*wq that fits the VMEM budget -------
    # Per grid step (BlockSpec double-buffers every operand):
    #   2*(x block) + 2*(y block)   [per-row part]  + 2*weight + stats [fixed]
    per_row = 2 * wq * (kpad * 2 + ceff * 2)              # bytes per hq-row
    fixed = 2 * kpad * ceff * 2 + 4 * 2 * ceff * 4
    tq = _pick_div_tile(hq, wq, per_row, budget - fixed)
    nt = hq // tq

    conv_out, stats = pl.pallas_call(
        _deconv_gemm_kernel,
        out_shape=(
            jax.ShapeDtypeStruct((n, hq * wq, ceff), jnp.bfloat16),
            jax.ShapeDtypeStruct((n, nt, 2, ceff), jnp.float32),
        ),
        grid=(n, nt),
        in_specs=[
            pl.BlockSpec((1, tq * wq, kpad), lambda b, t: (b, t, 0)),
            # Constant block index -> the small weight stays resident in VMEM
            # across all grid steps.
            pl.BlockSpec((kpad, ceff), lambda b, t: (0, 0)),
        ],
        out_specs=(
            pl.BlockSpec((1, tq * wq, ceff), lambda b, t: (b, t, 0)),
            pl.BlockSpec((1, 1, 2, ceff), lambda b, t: (b, t, 0, 0)),
        ),
        compiler_params=pltpu.CompilerParams(
            dimension_semantics=("parallel", "parallel"),
            vmem_limit_bytes=32 * 1024 * 1024),
    )(x_cols, wmat)

    # ---- finalize BN batch statistics (tiny: O(Cout)) ------------------------
    if bn:
        cnt = float(n * hout * wout)                      # N * Hout * Wout
        ch_sum = stats[:, :, 0, :].sum(axis=(0, 1)).reshape(s * s, cout).sum(0)
        ch_sq = stats[:, :, 1, :].sum(axis=(0, 1)).reshape(s * s, cout).sum(0)
        mean = ch_sum / cnt
        var = jnp.maximum(ch_sq / cnt - mean * mean, 0.0)
        scale = gamma.astype(jnp.float32) * lax.rsqrt(var + 1e-5)
        shift = beta.astype(jnp.float32) - mean * scale
    else:
        scale = jnp.ones((cout,), jnp.float32)
        shift = (bias.astype(jnp.float32) if bias is not None
                 else jnp.zeros((cout,), jnp.float32))
    # TODO(synk): BatchNorm running_mean/var (momentum) bookkeeping is not
    # emitted; it does not affect the training-mode forward output.
    # NOTE: when bn=True the module's ConvTranspose2d has no bias; a supplied
    # bias would be absorbed by the BN mean subtraction anyway.

    # ---- phase-major -> NCHW pixel unshuffle on the bf16 intermediate --------
    y5 = conv_out.reshape(n, hq, wq, s, s, cout)
    y_nchw = jnp.transpose(y5, (0, 5, 1, 3, 2, 4)).reshape(n * cout, hout, wout)
    # TODO(synk): for s*wq >= 128 this transpose could be folded into the
    # normalize kernel (in-tile rearrange + NCHW out_spec) to save one more
    # bf16 round trip; kept in XLA since a general 5-D in-kernel permute is
    # not on a guaranteed Mosaic lowering path.

    scale_rows = jnp.broadcast_to(
        jnp.tile(scale, n)[:, None, None], (n * cout, 1, wout)).astype(jnp.float32)
    shift_rows = jnp.broadcast_to(
        jnp.tile(shift, n)[:, None, None], (n * cout, 1, wout)).astype(jnp.float32)

    # ---- normalize + ReLU pass, writes the final NCHW f32 output directly ----
    per_row2 = 2 * wout * (2 + 4)          # bf16 in + f32 out, double-buffered
    th = _pick_div_tile(hout, 1, per_row2, budget)
    bn_kernel = functools.partial(_bn_act_nchw_kernel, relu=relu)
    out = pl.pallas_call(
        bn_kernel,
        out_shape=jax.ShapeDtypeStruct((n * cout, hout, wout), jnp.float32),
        grid=(n * cout, hout // th),
        in_specs=[
            pl.BlockSpec((1, th, wout), lambda g, t: (g, t, 0)),
            pl.BlockSpec((1, 1, wout), lambda g, t: (g, 0, 0)),
            pl.BlockSpec((1, 1, wout), lambda g, t: (g, 0, 0)),
        ],
        out_specs=pl.BlockSpec((1, th, wout), lambda g, t: (g, t, 0)),
        compiler_params=pltpu.CompilerParams(
            dimension_semantics=("parallel", "parallel"),
            vmem_limit_bytes=32 * 1024 * 1024),
    )(y_nchw, scale_rows, shift_rows)

    return out.reshape(n, cout, hout, wout)


# ----------------------------------------------------------------------------
# Reference (pure JAX) for sanity checking
# ----------------------------------------------------------------------------
def _reference(x_nchw, weight_t, gamma, beta, stride, relu=True, bn=True,
               bias=None):
    n, cin, h, w = x_nchw.shape
    _, cout, k, _ = weight_t.shape
    xb = x_nchw.astype(jnp.bfloat16).astype(jnp.float32)
    wb = weight_t.astype(jnp.bfloat16).astype(jnp.float32)
    x = jnp.transpose(xb, (0, 2, 3, 1))
    w_conv = jnp.transpose(wb[:, :, ::-1, ::-1], (2, 3, 0, 1))
    y = lax.conv_general_dilated(
        x, w_conv, window_strides=(1, 1),
        padding=[(k - 1, k - 1), (k - 1, k - 1)],
        lhs_dilation=(stride, stride),
        dimension_numbers=("NHWC", "HWIO", "NHWC"),
        precision=lax.Precision.HIGHEST)
    if stride == 2:
        y = y[:, :2 * h, :2 * w, :]
    # Mirror the kernel: the conv activation is stored (and re-read) as bf16.
    y = y.astype(jnp.bfloat16).astype(jnp.float32)
    if bias is not None and not bn:
        y = y + bias
    if bn:
        mean = jnp.mean(y, axis=(0, 1, 2), keepdims=True)
        var = jnp.mean((y - mean) ** 2, axis=(0, 1, 2), keepdims=True)
        y = (y - mean) * lax.rsqrt(var + 1e-5) * gamma + beta
    if relu:
        y = jnp.maximum(y, 0.0)
    return jnp.transpose(y, (0, 3, 1, 2))


# ----------------------------------------------------------------------------
# Main
# ----------------------------------------------------------------------------
if __name__ == "__main__":
    key = jax.random.PRNGKey(0)
    k_x, k_w, k_x1, k_w1 = jax.random.split(key, 4)

    # Deconv2d(in_channels=4, out_channels=8, kernel_size=3, stride=2,
    #          relu=True, bn=True)  -> ConvTranspose2d(bias=False)
    N, Cin, H, W = 2, 4, 16, 16
    Cout, K, STRIDE = 8, 3, 2

    x = jax.random.normal(k_x, (N, Cin, H, W), dtype=jnp.float32)

    # init_uniform stand-in: uniform(-b, b), b = 1/sqrt(fan_in)
    fan_in = Cin * K * K
    bound = 1.0 / float(fan_in) ** 0.5
    weight_t = jax.random.uniform(k_w, (Cin, Cout, K, K), dtype=jnp.float32,
                                  minval=-bound, maxval=bound)
    gamma = jnp.ones((Cout,), jnp.float32)   # init_bn
    beta = jnp.zeros((Cout,), jnp.float32)

    out = deconv2d_forward(x, weight_t, gamma, beta,
                           stride=STRIDE, relu=True, bn=True)
    out = jax.block_until_ready(out)
    ref = _reference(x, weight_t, gamma, beta, STRIDE, relu=True, bn=True)
    assert out.shape == (N, Cout, 2 * H, 2 * W), out.shape
    err = jnp.abs(out - ref)
    max_err, mean_err = float(err.max()), float(err.mean())
    # Max tolerance bounds a 1-ulp bf16 rounding flip (the conv activation is
    # stored in bf16) on a ~4-sigma value after BN standardization; typical
    # per-element error is <1e-5.
    assert max_err < 3e-2 and mean_err < 1e-3, (max_err, mean_err)

    # Also exercise the stride=1 path (no crop, single phase).
    x1 = jax.random.normal(k_x1, (N, Cin, 8, 8), dtype=jnp.float32)
    w1 = jax.random.uniform(k_w1, (Cin, Cout, K, K), dtype=jnp.float32,
                            minval=-bound, maxval=bound)
    out1 = deconv2d_forward(x1, w1, gamma, beta, stride=1, relu=True, bn=True)
    out1 = jax.block_until_ready(out1)
    ref1 = _reference(x1, w1, gamma, beta, 1, relu=True, bn=True)
    assert out1.shape == (N, Cout, 10, 10), out1.shape
    err1 = jnp.abs(out1 - ref1)
    assert float(err1.max()) < 3e-2 and float(err1.mean()) < 1e-3, (
        float(err1.max()), float(err1.mean()))

    print("KERNEL_OK")
</pallas_src>

<mosaic_0001>
module attributes {stable_mosaic.version = 11 : i64} {
  func.func @_deconv_gemm_kernel(%arg0: i32, %arg1: i32, %arg2: memref<1x256x16xbf16, #tpu.memory_space<vmem>>, %arg3: memref<16x32xbf16, #tpu.memory_space<vmem>>, %arg4: memref<1x256x32xbf16, #tpu.memory_space<vmem>>, %arg5: memref<1x1x2x32xf32, #tpu.memory_space<vmem>>) attributes {dimension_semantics = [#tpu.dimension_semantics<parallel>, #tpu.dimension_semantics<parallel>], iteration_bounds = array<i64: 2, 1>, scalar_prefetch = 0 : i64, scratch_operands = 0 : i64, tpu.core_type = #tpu.core_type<tc>, window_params = [{transform_indices = @transform_0, window_bounds = array<i64: 1, 256, 16>}, {pipeline_mode = #tpu.pipeline_mode<synchronous>, transform_indices = @transform_1, window_bounds = array<i64: 16, 32>}, {transform_indices = @transform_2, window_bounds = array<i64: 1, 256, 32>}, {transform_indices = @transform_3, window_bounds = array<i64: 1, 1, 2, 32>}]} {
    %c0 = arith.constant 0 : index
    %c0_0 = arith.constant 0 : index
    %c0_1 = arith.constant 0 : index
    %0 = vector.load %arg2[%c0, %c0_0, %c0_1] : memref<1x256x16xbf16, #tpu.memory_space<vmem>>, vector<1x256x16xbf16>
    %1 = vector.shape_cast %0 : vector<1x256x16xbf16> to vector<256x16xbf16>
    %c0_2 = arith.constant 0 : index
    %c0_3 = arith.constant 0 : index
    %2 = vector.load %arg3[%c0_2, %c0_3] : memref<16x32xbf16, #tpu.memory_space<vmem>>, vector<16x32xbf16>
    %cst = arith.constant dense<0.000000e+00> : vector<256x32xf32>
    %3 = tpu.matmul %1, %2, %cst {dimension_numbers = #tpu.dot_dimension_numbers<[1], [0], [0], [1], [0, 0, 1, 1], [], []>} : vector<256x16xbf16>, vector<16x32xbf16>, vector<256x32xf32> -> vector<256x32xf32>
    %4 = arith.truncf %3 : vector<256x32xf32> to vector<256x32xbf16>
    %c0_4 = arith.constant 0 : index
    %c0_5 = arith.constant 0 : index
    %c0_6 = arith.constant 0 : index
    %5 = vector.load %arg4[%c0_4, %c0_5, %c0_6] : memref<1x256x32xbf16, #tpu.memory_space<vmem>>, vector<1x256x32xbf16>
    %6 = vector.shape_cast %5 : vector<1x256x32xbf16> to vector<256x32xbf16>
    %7 = vector.shape_cast %4 : vector<256x32xbf16> to vector<1x256x32xbf16>
    tpu.vector_store %arg4[%c0_4, %c0_5, %c0_6], %7 {strides = array<i32>} : memref<1x256x32xbf16, #tpu.memory_space<vmem>>, vector<1x256x32xbf16>,
    %8 = arith.extf %4 : vector<256x32xbf16> to vector<256x32xf32>
    %cst_7 = arith.constant dense<0.000000e+00> : vector<32xf32>
    %9 = vector.multi_reduction <add>, %8, %cst_7 [0] : vector<256x32xf32> to vector<32xf32>
    %10 = vector.shape_cast %9 : vector<32xf32> to vector<1x32xf32>
    %11 = arith.mulf %8, %8 : vector<256x32xf32>
    %cst_8 = arith.constant dense<0.000000e+00> : vector<32xf32>
    %12 = vector.multi_reduction <add>, %11, %cst_8 [0] : vector<256x32xf32> to vector<32xf32>
    %13 = vector.shape_cast %12 : vector<32xf32> to vector<1x32xf32>
    %14 = tpu.concatenate %10, %13 in 0 : vector<1x32xf32>, vector<1x32xf32> -> vector<2x32xf32>
    %c0_9 = arith.constant 0 : index
    %c0_10 = arith.constant 0 : index
    %c0_11 = arith.constant 0 : index
    %c0_12 = arith.constant 0 : index
    %15 = vector.load %arg5[%c0_9, %c0_10, %c0_11, %c0_12] : memref<1x1x2x32xf32, #tpu.memory_space<vmem>>, vector<1x1x2x32xf32>
    %16 = vector.shape_cast %15 : vector<1x1x2x32xf32> to vector<2x32xf32>
    %17 = vector.shape_cast %14 : vector<2x32xf32> to vector<1x1x2x32xf32>
    tpu.vector_store %arg5[%c0_9, %c0_10, %c0_11, %c0_12], %17 {strides = array<i32>} : memref<1x1x2x32xf32, #tpu.memory_space<vmem>>, vector<1x1x2x32xf32>,
    return
  }
  func.func @transform_0(%arg0: i32, %arg1: i32) -> (i32, i32, i32) {
    %c0_i32 = arith.constant 0 : i32
    %c0_i32_0 = arith.constant 0 : i32
    return %arg0, %arg1, %c0_i32 : i32, i32, i32
  }
  func.func @transform_1(%arg0: i32, %arg1: i32) -> (i32, i32) {
    %c0_i32 = arith.constant 0 : i32
    %c0_i32_0 = arith.constant 0 : i32
    %c0_i32_1 = arith.constant 0 : i32
    return %c0_i32, %c0_i32_0 : i32, i32
  }
  func.func @transform_2(%arg0: i32, %arg1: i32) -> (i32, i32, i32) {
    %c0_i32 = arith.constant 0 : i32
    %c0_i32_0 = arith.constant 0 : i32
    return %arg0, %arg1, %c0_i32 : i32, i32, i32
  }
  func.func @transform_3(%arg0: i32, %arg1: i32) -> (i32, i32, i32, i32) {
    %c0_i32 = arith.constant 0 : i32
    %c0_i32_0 = arith.constant 0 : i32
    %c0_i32_1 = arith.constant 0 : i32
    return %arg0, %arg1, %c0_i32, %c0_i32_0 : i32, i32, i32, i32
  }
}

module attributes {stable_mosaic.version = 11 : i64} {
  func.func @_bn_act_nchw_kernel(%arg0: i32, %arg1: i32, %arg2: memref<1x32x32xbf16, #tpu.memory_space<vmem>>, %arg3: memref<1x1x32xf32, #tpu.memory_space<vmem>>, %arg4: memref<1x1x32xf32, #tpu.memory_space<vmem>>, %arg5: memref<1x32x32xf32, #tpu.memory_space<vmem>>) attributes {dimension_semantics = [#tpu.dimension_semantics<parallel>, #tpu.dimension_semantics<parallel>], iteration_bounds = array<i64: 16, 1>, scalar_prefetch = 0 : i64, scratch_operands = 0 : i64, tpu.core_type = #tpu.core_type<tc>, window_params = [{transform_indices = @transform_0, window_bounds = array<i64: 1, 32, 32>}, {transform_indices = @transform_1, window_bounds = array<i64: 1, 1, 32>}, {transform_indices = @transform_2, window_bounds = array<i64: 1, 1, 32>}, {transform_indices = @transform_3, window_bounds = array<i64: 1, 32, 32>}]} {
    %c0 = arith.constant 0 : index
    %c0_0 = arith.constant 0 : index
    %c0_1 = arith.constant 0 : index
    %0 = vector.load %arg2[%c0, %c0_0, %c0_1] : memref<1x32x32xbf16, #tpu.memory_space<vmem>>, vector<1x32x32xbf16>
    %1 = vector.shape_cast %0 : vector<1x32x32xbf16> to vector<32x32xbf16>
    %2 = arith.extf %1 : vector<32x32xbf16> to vector<32x32xf32>
    %c0_2 = arith.constant 0 : index
    %c0_3 = arith.constant 0 : index
    %c0_4 = arith.constant 0 : index
    %3 = vector.load %arg3[%c0_2, %c0_3, %c0_4] : memref<1x1x32xf32, #tpu.memory_space<vmem>>, vector<1x1x32xf32>
    %4 = vector.shape_cast %3 : vector<1x1x32xf32> to vector<1x32xf32>
    %5 = vector.broadcast %4 : vector<1x32xf32> to vector<32x32xf32>
    %6 = arith.mulf %2, %5 : vector<32x32xf32>
    %c0_5 = arith.constant 0 : index
    %c0_6 = arith.constant 0 : index
    %c0_7 = arith.constant 0 : index
    %7 = vector.load %arg4[%c0_5, %c0_6, %c0_7] : memref<1x1x32xf32, #tpu.memory_space<vmem>>, vector<1x1x32xf32>
    %8 = vector.shape_cast %7 : vector<1x1x32xf32> to vector<1x32xf32>
    %9 = vector.broadcast %8 : vector<1x32xf32> to vector<32x32xf32>
    %10 = arith.addf %6, %9 : vector<32x32xf32>
    %cst = arith.constant 0.000000e+00 : f32
    %11 = vector.broadcast %cst : f32 to vector<32x32xf32>
    %12 = arith.maximumf %10, %11 : vector<32x32xf32>
    %c0_8 = arith.constant 0 : index
    %c0_9 = arith.constant 0 : index
    %c0_10 = arith.constant 0 : index
    %13 = vector.load %arg5[%c0_8, %c0_9, %c0_10] : memref<1x32x32xf32, #tpu.memory_space<vmem>>, vector<1x32x32xf32>
    %14 = vector.shape_cast %13 : vector<1x32x32xf32> to vector<32x32xf32>
    %15 = vector.shape_cast %12 : vector<32x32xf32> to vector<1x32x32xf32>
    tpu.vector_store %arg5[%c0_8, %c0_9, %c0_10], %15 {strides = array<i32>} : memref<1x32x32xf32, #tpu.memory_space<vmem>>, vector<1x32x32xf32>,
    return
  }
  func.func @transform_0(%arg0: i32, %arg1: i32) -> (i32, i32, i32) {
    %c0_i32 = arith.constant 0 : i32
    %c0_i32_0 = arith.constant 0 : i32
    return %arg0, %arg1, %c0_i32 : i32, i32, i32
  }
  func.func @transform_1(%arg0: i32, %arg1: i32) -> (i32, i32, i32) {
    %c0_i32 = arith.constant 0 : i32
    %c0_i32_0 = arith.constant 0 : i32
    %c0_i32_1 = arith.constant 0 : i32
    return %arg0, %c0_i32, %c0_i32_0 : i32, i32, i32
  }
  func.func @transform_2(%arg0: i32, %arg1: i32) -> (i32, i32, i32) {
    %c0_i32 = arith.constant 0 : i32
    %c0_i32_0 = arith.constant 0 : i32
    %c0_i32_1 = arith.constant 0 : i32
    return %arg0, %c0_i32, %c0_i32_0 : i32, i32, i32
  }
  func.func @transform_3(%arg0: i32, %arg1: i32) -> (i32, i32, i32) {
    %c0_i32 = arith.constant 0 : i32
    %c0_i32_0 = arith.constant 0 : i32
    return %arg0, %arg1, %c0_i32 : i32, i32, i32
  }
}

</mosaic_0001>

<llo_original>
// kernel: deconv2d_forward.2
$region0: #{deconv2d_forward.2}
  #allocation0 [shape = 'u32[]', space=smem, size = 0x4, offset = 0x4, fixed_abs, tag = 'smem constant byte address 0x4 - core index']
  #allocation1 [shape = 'u32[72,128]{1,0:T(1,128)}', space=vmem, size = 0x9000, scoped, tag = 'internal scratch']
  %s0 = inlined_call_operand.vmem [shape: bf16[2,256,16], index: 0, kind: input, shape index: {}]
  %s1 = inlined_call_operand.vmem [shape: bf16[16,32], index: 1, kind: input, shape index: {}]
  %s2 = inlined_call_operand.vmem [shape: bf16[2,256,32], index: 2, kind: output, shape index: {0}]
  %s3 = inlined_call_operand.vmem [shape: f32[2,1,2,32], index: 3, kind: output, shape index: {1}]
  %4 = xla_tuple %s2, %s3
  %s5 = sld [smem:[#allocation0]]
  $region49: #{deconv2d_forward.2} parent=0
    _
  %s7 = ssub.s32 1, %s5
  %s8 = scalar_select 0, %s7, %s5
  loop: start=0, step=1, limit=4
  $region2: #{deconv2d_forward.2} parent=0 // loop_pre_header
    _
  $region3: #{deconv2d_forward.2} parent=0 // loop_header
    %s10 = sphi 0, %s14
    %p11 = scmp.ge.s32.totalorder %s10, 4
    %s17 = sphi 0, %s29
    %s18 = sphi 0, %s25
    %s19 = sphi 0, %s17
    %s20 = sphi 0, %s18
    %s21 = sphi 0, %s19
    %s22 = sphi 0, %s20
    %s34 = sphi 0, %s36
    %s37 = sphi 0, %s34
    %s38 = sphi 0, %s37
    %s54 = sphi 0, %s38
    %s58 = sphi 0, %s58
    %s60 = sphi 0, %s58
    %s61 = sphi 0, %s60
    %s75 = sphi 0, %s61
    %s83 = sphi 0, %s85
    %s86 = sphi 0, %s83
    %s87 = sphi 0, %s86
    %s103 = sphi 0, %s87
    %s111 = sphi 0, %s113
    %s114 = sphi 0, %s111
    %s115 = sphi 0, %s114
    %s131 = sphi 0, %s115
  $region4: #{deconv2d_forward.2} parent=0 // loop_header_branch
    %13 = sbr.rel (%p11) target = $region8
  $region5: #{deconv2d_forward.2} parent=0 // loop_body
    %s15 = ssub.s32 %s10, 1
    %s16 = ssub.s32 %s10, 2
    %s23 = sadd.s32 1, %s18
    %p24 = scmp.ge.s32.totalorder %s23, 1
    %s25 = scalar_select %p24, 0, %s23
    %s26 = sadd.s32 1, %s17
    %s27 = scalar_select %p24, %s26, %s17
    %p28 = scmp.ge.s32.totalorder %s27, 2
    %s29 = scalar_select %p28, 0, %s27
    %s30 = ssub.s32 %s17, %s29
    %s31 = ssub.s32 %s18, %s25
    %s32 = sor.u32 %s30, %s31
    %p33 = scmp.eq.s32.totalorder %s32, 0
    %s35 = sadd.s32 %s34, 1
    %s36 = scalar_select %p33, %s34, %s35
    %p39 = pneg %p33
    %p40 = scmp.eq.s32.totalorder %s10, 1
    %p41 = por %p39, %p40
    %p42 = scmp.ne.s32.totalorder %s34, %s37
    %p43 = scmp.eq.s32.totalorder %s10, 0
    %p44 = por %p42, %p43
    %p45 = scmp.ne.s32.totalorder %s34, %s37
    %p46 = scmp.eq.s32.totalorder %s15, 1
    %p47 = por %p45, %p46
    %p48 = scmp.ne.s32.totalorder %s37, %s38
    %p49 = scmp.eq.s32.totalorder %s15, 0
    %p50 = por %p48, %p49
    %p51 = scmp.ne.s32.totalorder %s37, %s38
    %p52 = scmp.eq.s32.totalorder %s16, 1
    %p53 = por %p51, %p52
    %p55 = scmp.ne.s32.totalorder %s38, %s54
    %p56 = scmp.eq.s32.totalorder %s16, 0
    %p57 = por %p55, %p56
    %s59 = sadd.s32 %s58, 1
    %p62 = scmp.eq.s32.totalorder %s10, 1
    %p63 = scmp.ne.s32.totalorder %s58, %s60
    %p64 = scmp.eq.s32.totalorder %s10, 0
    %p65 = por %p63, %p64
    %p66 = scmp.ne.s32.totalorder %s58, %s60
    %p67 = scmp.eq.s32.totalorder %s15, 1
    %p68 = por %p66, %p67
    %p69 = scmp.ne.s32.totalorder %s60, %s61
    %p70 = scmp.eq.s32.totalorder %s15, 0
    %p71 = por %p69, %p70
    %p72 = scmp.ne.s32.totalorder %s60, %s61
    %p73 = scmp.eq.s32.totalorder %s16, 1
    %p74 = por %p72, %p73
    %p76 = scmp.ne.s32.totalorder %s61, %s75
    %p77 = scmp.eq.s32.totalorder %s16, 0
    %p78 = por %p76, %p77
    %s79 = ssub.s32 %s17, %s29
    %s80 = ssub.s32 %s18, %s25
    %s81 = sor.u32 %s79, %s80
    %p82 = scmp.eq.s32.totalorder %s81, 0
    %s84 = sadd.s32 %s83, 1
    %s85 = scalar_select %p82, %s83, %s84
    %p88 = pneg %p82
    %p89 = scmp.eq.s32.totalorder %s10, 1
    %p90 = por %p88, %p89
    %p91 = scmp.ne.s32.totalorder %s83, %s86
    %p92 = scmp.eq.s32.totalorder %s10, 0
    %p93 = por %p91, %p92
    %p94 = scmp.ne.s32.totalorder %s83, %s86
    %p95 = scmp.eq.s32.totalorder %s15, 1
    %p96 = por %p94, %p95
    %p97 = scmp.ne.s32.totalorder %s86, %s87
    %p98 = scmp.eq.s32.totalorder %s15, 0
    %p99 = por %p97, %p98
    %p100 = scmp.ne.s32.totalorder %s86, %s87
    %p101 = scmp.eq.s32.totalorder %s16, 1
    %p102 = por %p100, %p101
    %p104 = scmp.ne.s32.totalorder %s87, %s103
    %p105 = scmp.eq.s32.totalorder %s16, 0
    %p106 = por %p104, %p105
    %s107 = ssub.s32 %s17, %s29
    %s108 = ssub.s32 %s18, %s25
    %s109 = sor.u32 %s107, %s108
    %p110 = scmp.eq.s32.totalorder %s109, 0
    %s112 = sadd.s32 %s111, 1
    %s113 = scalar_select %p110, %s111, %s112
    %p116 = pneg %p110
    %p117 = scmp.eq.s32.totalorder %s10, 1
    %p118 = por %p116, %p117
    %p119 = scmp.ne.s32.totalorder %s111, %s114
    %p120 = scmp.eq.s32.totalorder %s10, 0
    %p121 = por %p119, %p120
    %p122 = scmp.ne.s32.totalorder %s111, %s114
    %p123 = scmp.eq.s32.totalorder %s15, 1
    %p124 = por %p122, %p123
    %p125 = scmp.ne.s32.totalorder %s114, %s115
    %p126 = scmp.eq.s32.totalorder %s15, 0
    %p127 = por %p125, %p126
    %p128 = scmp.ne.s32.totalorder %s114, %s115
    %p129 = scmp.eq.s32.totalorder %s16, 1
    %p130 = por %p128, %p129
    %p132 = scmp.ne.s32.totalorder %s115, %s131
    %p133 = scmp.eq.s32.totalorder %s16, 0
    %p134 = por %p132, %p133
    %p135 = scmp.le.s32.totalorder 1, %s10
    %p136 = scmp.lt.s32.totalorder %s10, 3
    %p137 = pnand %p135, %p136
    %p138 = pneg %p137
    // Predicated region
    $region9: #{deconv2d_forward.2} parent=5 // pred_check
      _
    $region10: #{deconv2d_forward.2} parent=5 // pred_check_branch
      %140 = sbr.rel (%p137) target = $region12
    $region11: #{deconv2d_forward.2} parent=5 // pred_region
      %s141 = ssub.s32 %s10, 1
      // Predicated region
      $region13: #{deconv2d_forward.2} parent=11 // pred_check
        %p142 = pneg %p71
      $region14: #{deconv2d_forward.2} parent=11 // pred_check_branch
        %144 = sbr.rel (%p142) target = $region16
      $region15: #{deconv2d_forward.2} parent=11 // pred_region
        _
      $region16: #{deconv2d_forward.2} parent=11 // pred_fallthru
        _
    $region12: #{deconv2d_forward.2} parent=5 // pred_fallthru
      _
    %p145 = scmp.lt.s32.totalorder %s10, 2
    // Predicated region
    $region17: #{deconv2d_forward.2} parent=5 // pred_check
      %p146 = pneg %p145
    $region18: #{deconv2d_forward.2} parent=5 // pred_check_branch
      %148 = sbr.rel (%p146) target = $region20
    $region19: #{deconv2d_forward.2} parent=5 // pred_region
      // Predicated region
      $region21: #{deconv2d_forward.2} parent=19 // pred_check
        %p149 = pneg %p44
      $region22: #{deconv2d_forward.2} parent=19 // pred_check_branch
        %151 = sbr.rel (%p149) target = $region24
      $region23: #{deconv2d_forward.2} parent=19 // pred_region
        %s152 = smul.u32 32, %s18
        %p153 = scmp.lt.s32.totalorder %s17, 1
        %s154 = scalar_select %p153, %s17, 1
        %p155 = scmp.lt.s32.totalorder %s152, 31
        %s156 = scalar_select %p155, %s152, 31
        %s157 = smul.addr %s154, 32
        %s158 = sadd.s32 %s156, %s157
        %s159 = smul.addr %s158, 4
        %s160 = scalar_lea.vmem %s0, %s159
        %s161 = smul.u32 32, %s18
      $region24: #{deconv2d_forward.2} parent=19 // pred_fallthru
        _
    $region20: #{deconv2d_forward.2} parent=5 // pred_fallthru
      _
    %p162 = scmp.le.s32.totalorder 1, %s10
    %p163 = scmp.lt.s32.totalorder %s10, 3
    %p164 = pnand %p162, %p163
    %p165 = pneg %p164
    // Predicated region
    $region25: #{deconv2d_forward.2} parent=5 // pred_check
      _
    $region26: #{deconv2d_forward.2} parent=5 // pred_check_branch
      %167 = sbr.rel (%p164) target = $region28
    $region27: #{deconv2d_forward.2} parent=5 // pred_region
      %s168 = ssub.s32 %s10, 1
      %s169 = smul.u32 32, %s20
      %p170 = scmp.lt.s32.totalorder %s19, 1
      %s171 = scalar_select %p170, %s19, 1
      %p172 = scmp.lt.s32.totalorder %s169, 31
      %s173 = scalar_select %p172, %s169, 31
      %s174 = smul.addr %s171, 32
      %s175 = sadd.s32 %s173, %s174
      %s176 = smul.addr %s175, 4
      %s177 = scalar_lea.vmem %s0, %s176
      %p178 = pneg %p50
      %p179 = pneg %p47
      %p180 = pneg %p71
      %p181 = pneg %p68
      %p182 = pneg %p99
      %p183 = pneg %p96
      %s184 = smul.u32 32, %s20
      %p185 = scmp.lt.s32.totalorder %s19, 1
      %s186 = scalar_select %p185, %s19, 1
      %p187 = scmp.lt.s32.totalorder %s184, 31
      %s188 = scalar_select %p187, %s184, 31
      %s189 = smul.addr %s186, 32
      %s190 = sadd.s32 %s188, %s189
      %s191 = smul.addr %s190, 4
      %s192 = scalar_lea.vmem %s2, %s191
      %p193 = pneg %p127
      %p194 = pneg %p124
      %p195 = scmp.lt.s32.totalorder %s19, 1
      %s196 = scalar_select %p195, %s19, 1
      %p197 = scmp.lt.s32.totalorder %s20, 0
      %s198 = scalar_select %p197, %s20, 0
      %s199 = sadd.s32 %s198, %s196
      %s200 = smul.addr %s199, 2
      %s201 = scalar_lea.vmem %s3, %s200
      %s202 = smul.u32 32, %s20
      %p203 = scmp.lt.s32.totalorder %s19, 1
      %s204 = scalar_select %p203, %s19, 1
      %p205 = scmp.lt.s32.totalorder %s202, 31
      %s206 = scalar_select %p205, %s202, 31
      %s207 = smul.addr %s204, 32
      %s208 = sadd.s32 %s206, %s207
      %s209 = smul.addr %s208, 4
      %s210 = scalar_lea.vmem %s0, %s209
      %s211 = smul.u32 32, %s20
      %s212 = smul.u32 32, %s20
      %p213 = scmp.lt.s32.totalorder %s19, 1
      %s214 = scalar_select %p213, %s19, 1
      %p215 = scmp.lt.s32.totalorder %s212, 31
      %s216 = scalar_select %p215, %s212, 31
      %s217 = smul.addr %s214, 32
      %s218 = sadd.s32 %s216, %s217
      %s219 = smul.addr %s218, 4
      %s220 = scalar_lea.vmem %s2, %s219
      %s221 = smul.u32 32, %s20
      %p222 = scmp.lt.s32.totalorder %s19, 1
      %s223 = scalar_select %p222, %s19, 1
      %p224 = scmp.lt.s32.totalorder %s20, 0
      %s225 = scalar_select %p224, %s20, 0
      %s226 = sadd.s32 %s225, %s223
      %s227 = smul.addr %s226, 2
      %s228 = scalar_lea.vmem %s3, %s227
      %v230 = vld [vmem:[%s210] sm:$0xf]
      %v231 = vld [vmem:[%s210 + $0x4] sm:$0xf]
      %v232 = vld [vmem:[%s210 + $0x8] sm:$0xf]
      %v233 = vld [vmem:[%s210 + $0xc] sm:$0xf]
      %v234 = vld [vmem:[%s210 + $0x10] sm:$0xf]
      %v235 = vld [vmem:[%s210 + $0x14] sm:$0xf]
      %v236 = vld [vmem:[%s210 + $0x18] sm:$0xf]
      %v237 = vld [vmem:[%s210 + $0x1c] sm:$0xf]
      %v238 = vld [vmem:[%s210 + $0x20] sm:$0xf]
      %v239 = vld [vmem:[%s210 + $0x24] sm:$0xf]
      %v240 = vld [vmem:[%s210 + $0x28] sm:$0xf]
      %v241 = vld [vmem:[%s210 + $0x2c] sm:$0xf]
      %v242 = vld [vmem:[%s210 + $0x30] sm:$0xf]
      %v243 = vld [vmem:[%s210 + $0x34] sm:$0xf]
      %v244 = vld [vmem:[%s210 + $0x38] sm:$0xf]
      %v245 = vld [vmem:[%s210 + $0x3c] sm:$0xf]
      %v246 = vld [vmem:[%s210 + $0x40] sm:$0xf]
      %v247 = vld [vmem:[%s210 + $0x44] sm:$0xf]
      %v248 = vld [vmem:[%s210 + $0x48] sm:$0xf]
      %v249 = vld [vmem:[%s210 + $0x4c] sm:$0xf]
      %v250 = vld [vmem:[%s210 + $0x50] sm:$0xf]
      %v251 = vld [vmem:[%s210 + $0x54] sm:$0xf]
      %v252 = vld [vmem:[%s210 + $0x58] sm:$0xf]
      %v253 = vld [vmem:[%s210 + $0x5c] sm:$0xf]
      %v254 = vld [vmem:[%s210 + $0x60] sm:$0xf]
      %v255 = vld [vmem:[%s210 + $0x64] sm:$0xf]
      %v256 = vld [vmem:[%s210 + $0x68] sm:$0xf]
      %v257 = vld [vmem:[%s210 + $0x6c] sm:$0xf]
      %v258 = vld [vmem:[%s210 + $0x70] sm:$0xf]
      %v259 = vld [vmem:[%s210 + $0x74] sm:$0xf]
      %v260 = vld [vmem:[%s210 + $0x78] sm:$0xf]
      %v261 = vld [vmem:[%s210 + $0x7c] sm:$0xf]
      %v262 = vld [vmem:[%s1] sm:$0xf]
      %v263 = vld [vmem:[%s1 + $0x4] sm:$0xf]
      %v296 = vunpack.c.l.b16 %v230
      %v297 = vunpack.c.l.b16 %v231
      %v298 = vunpack.c.l.b16 %v232
      %v299 = vunpack.c.l.b16 %v233
      %v300 = vunpack.c.l.b16 %v234
      %v301 = vunpack.c.l.b16 %v235
      %v302 = vunpack.c.l.b16 %v236
      %v303 = vunpack.c.l.b16 %v237
      %v304 = vunpack.c.l.b16 %v238
      %v305 = vunpack.c.l.b16 %v239
      %v306 = vunpack.c.l.b16 %v240
      %v307 = vunpack.c.l.b16 %v241
      %v308 = vunpack.c.l.b16 %v242
      %v309 = vunpack.c.l.b16 %v243
      %v310 = vunpack.c.l.b16 %v244
      %v311 = vunpack.c.l.b16 %v245
      %v312 = vunpack.c.l.b16 %v246
      %v313 = vunpack.c.l.b16 %v247
      %v314 = vunpack.c.l.b16 %v248
      %v315 = vunpack.c.l.b16 %v249
      %v316 = vunpack.c.l.b16 %v250
      %v317 = vunpack.c.l.b16 %v251
      %v318 = vunpack.c.l.b16 %v252
      %v319 = vunpack.c.l.b16 %v253
      %v320 = vunpack.c.l.b16 %v254
      %v321 = vunpack.c.l.b16 %v255
      %v322 = vunpack.c.l.b16 %v256
      %v323 = vunpack.c.l.b16 %v257
      %v324 = vunpack.c.l.b16 %v258
      %v325 = vunpack.c.l.b16 %v259
      %v326 = vunpack.c.l.b16 %v260
      %v327 = vunpack.c.l.b16 %v261
      %v328 = vpack.c.b16 %v297, %v296
      %v329 = vpack.c.b16 %v299, %v298
      %v330 = vpack.c.b16 %v301, %v300
      %v331 = vpack.c.b16 %v303, %v302
      %v332 = vpack.c.b16 %v305, %v304
      %v333 = vpack.c.b16 %v307, %v306
      %v334 = vpack.c.b16 %v309, %v308
      %v335 = vpack.c.b16 %v311, %v310
      %v336 = vpack.c.b16 %v313, %v312
      %v337 = vpack.c.b16 %v315, %v314
      %v338 = vpack.c.b16 %v317, %v316
      %v339 = vpack.c.b16 %v319, %v318
      %v340 = vpack.c.b16 %v321, %v320
      %v341 = vpack.c.b16 %v323, %v322
      %v342 = vpack.c.b16 %v325, %v324
      %v343 = vpack.c.b16 %v327, %v326
      %v346 = vunpack.c.l.b16 %v262
      %v347 = vunpack.c.l.b16 %v263
      %v348 = vpack.c.b16 %v347, %v346
      %vm350 = vcmask 130048
      %v352 = vsel %vm350, %v328, 0
      %v355 = vsel %vm350, %v329, 0
      %v358 = vsel %vm350, %v330, 0
      %v361 = vsel %vm350, %v331, 0
      %v364 = vsel %vm350, %v332, 0
      %v367 = vsel %vm350, %v333, 0
      %v370 = vsel %vm350, %v334, 0
      %v373 = vsel %vm350, %v335, 0
      %v376 = vsel %vm350, %v336, 0
      %v379 = vsel %vm350, %v337, 0
      %v382 = vsel %vm350, %v338, 0
      %v385 = vsel %vm350, %v339, 0
      %v388 = vsel %vm350, %v340, 0
      %v391 = vsel %vm350, %v341, 0
      %v394 = vsel %vm350, %v342, 0
      %v397 = vsel %vm350, %v343, 0
      %399 = vmatpush.bf16.msra.mxu0 0
      %400 = vmatpush.bf16.msra.mxu0 0
      %401 = vmatpush.bf16.msra.mxu0 0
      %402 = vmatpush.bf16.msra.mxu0 0
      %403 = vmatpush.bf16.msra.mxu0 0
      %404 = vmatpush.bf16.msra.mxu0 0
      %405 = vmatpush.bf16.msra.mxu0 0
      %406 = vmatpush.bf16.msra.mxu0 %v348
      %407 = vmatmul.bf16.gmra.mxu0 %v352
      %v408 = vpop.f32.mrf.mxu0
      %v409 = vadd.f32 0.0, %v408
      %v410 = vpop.f32.mrf.mxu0
      %v411 = vadd.f32 0.0, %v410
      %412 = vmatmul.bf16.gmra.mxu0 %v355
      %v413 = vpop.f32.mrf.mxu0
      %v414 = vadd.f32 0.0, %v413
      %v415 = vpop.f32.mrf.mxu0
      %v416 = vadd.f32 0.0, %v415
      %417 = vmatmul.bf16.gmra.mxu0 %v358
      %v418 = vpop.f32.mrf.mxu0
      %v419 = vadd.f32 0.0, %v418
      %v420 = vpop.f32.mrf.mxu0
      %v421 = vadd.f32 0.0, %v420
      %422 = vmatmul.bf16.gmra.mxu0 %v361
      %v423 = vpop.f32.mrf.mxu0
      %v424 = vadd.f32 0.0, %v423
      %v425 = vpop.f32.mrf.mxu0
      %v426 = vadd.f32 0.0, %v425
      %427 = vmatmul.bf16.gmra.mxu0 %v364
      %v428 = vpop.f32.mrf.mxu0
      %v429 = vadd.f32 0.0, %v428
      %v430 = vpop.f32.mrf.mxu0
      %v431 = vadd.f32 0.0, %v430
      %432 = vmatmul.bf16.gmra.mxu0 %v367
      %v433 = vpop.f32.mrf.mxu0
      %v434 = vadd.f32 0.0, %v433
      %v435 = vpop.f32.mrf.mxu0
      %v436 = vadd.f32 0.0, %v435
      %437 = vmatmul.bf16.gmra.mxu0 %v370
      %v438 = vpop.f32.mrf.mxu0
      %v439 = vadd.f32 0.0, %v438
      %v440 = vpop.f32.mrf.mxu0
      %v441 = vadd.f32 0.0, %v440
      %442 = vmatmul.bf16.gmra.mxu0 %v373
      %v443 = vpop.f32.mrf.mxu0
      %v444 = vadd.f32 0.0, %v443
      %v445 = vpop.f32.mrf.mxu0
      %v446 = vadd.f32 0.0, %v445
      %447 = vmatmul.bf16.gmra.mxu0 %v376
      %v448 = vpop.f32.mrf.mxu0
      %v449 = vadd.f32 0.0, %v448
      %v450 = vpop.f32.mrf.mxu0
      %v451 = vadd.f32 0.0, %v450
      %452 = vmatmul.bf16.gmra.mxu0 %v379
      %v453 = vpop.f32.mrf.mxu0
      %v454 = vadd.f32 0.0, %v453
      %v455 = vpop.f32.mrf.mxu0
      %v456 = vadd.f32 0.0, %v455
      %457 = vmatmul.bf16.gmra.mxu0 %v382
      %v458 = vpop.f32.mrf.mxu0
      %v459 = vadd.f32 0.0, %v458
      %v460 = vpop.f32.mrf.mxu0
      %v461 = vadd.f32 0.0, %v460
      %462 = vmatmul.bf16.gmra.mxu0 %v385
      %v463 = vpop.f32.mrf.mxu0
      %v464 = vadd.f32 0.0, %v463
      %v465 = vpop.f32.mrf.mxu0
      %v466 = vadd.f32 0.0, %v465
      %467 = vmatmul.bf16.gmra.mxu0 %v388
      %v468 = vpop.f32.mrf.mxu0
      %v469 = vadd.f32 0.0, %v468
      %v470 = vpop.f32.mrf.mxu0
      %v471 = vadd.f32 0.0, %v470
      %472 = vmatmul.bf16.gmra.mxu0 %v391
      %v473 = vpop.f32.mrf.mxu0
      %v474 = vadd.f32 0.0, %v473
      %v475 = vpop.f32.mrf.mxu0
      %v476 = vadd.f32 0.0, %v475
      %477 = vmatmul.bf16.gmra.mxu0 %v394
      %v478 = vpop.f32.mrf.mxu0
      %v479 = vadd.f32 0.0, %v478
      %v480 = vpop.f32.mrf.mxu0
      %v481 = vadd.f32 0.0, %v480
      %482 = vmatmul.bf16.gmra.mxu0 %v397
      %v483 = vpop.f32.mrf.mxu0
      %v484 = vadd.f32 0.0, %v483
      %v485 = vpop.f32.mrf.mxu0
      %v486 = vadd.f32 0.0, %v485
      %487 = vdwg.mxu0
      %v488 = vpack.c.bf16 %v409, %v409
      %v489 = vpack.c.bf16 %v411, %v411
      %v490 = vpack.c.bf16 %v414, %v414
      %v491 = vpack.c.bf16 %v416, %v416
      %v492 = vpack.c.bf16 %v419, %v419
      %v493 = vpack.c.bf16 %v421, %v421
      %v494 = vpack.c.bf16 %v424, %v424
      %v495 = vpack.c.bf16 %v426, %v426
      %v496 = vpack.c.bf16 %v429, %v429
      %v497 = vpack.c.bf16 %v431, %v431
      %v498 = vpack.c.bf16 %v434, %v434
      %v499 = vpack.c.bf16 %v436, %v436
      %v500 = vpack.c.bf16 %v439, %v439
      %v501 = vpack.c.bf16 %v441, %v441
      %v502 = vpack.c.bf16 %v444, %v444
      %v503 = vpack.c.bf16 %v446, %v446
      %v504 = vpack.c.bf16 %v449, %v449
      %v505 = vpack.c.bf16 %v451, %v451
      %v506 = vpack.c.bf16 %v454, %v454
      %v507 = vpack.c.bf16 %v456, %v456
      %v508 = vpack.c.bf16 %v459, %v459
      %v509 = vpack.c.bf16 %v461, %v461
      %v510 = vpack.c.bf16 %v464, %v464
      %v511 = vpack.c.bf16 %v466, %v466
      %v512 = vpack.c.bf16 %v469, %v469
      %v513 = vpack.c.bf16 %v471, %v471
      %v514 = vpack.c.bf16 %v474, %v474
      %v515 = vpack.c.bf16 %v476, %v476
      %v516 = vpack.c.bf16 %v479, %v479
      %v517 = vpack.c.bf16 %v481, %v481
      %v518 = vpack.c.bf16 %v484, %v484
      %v519 = vpack.c.bf16 %v486, %v486
      %vm520 = vcmask 257024
      %521 = vst.msk [vmem:[%s220] sm:$0xf] %vm520, %v488
      %522 = vst.msk [vmem:[%s220 + $0x4] sm:$0xf] %vm520, %v489
      %523 = vst.msk [vmem:[%s220 + $0x8] sm:$0xf] %vm520, %v490
      %524 = vst.msk [vmem:[%s220 + $0xc] sm:$0xf] %vm520, %v491
      %525 = vst.msk [vmem:[%s220 + $0x10] sm:$0xf] %vm520, %v492
      %526 = vst.msk [vmem:[%s220 + $0x14] sm:$0xf] %vm520, %v493
      %527 = vst.msk [vmem:[%s220 + $0x18] sm:$0xf] %vm520, %v494
      %528 = vst.msk [vmem:[%s220 + $0x1c] sm:$0xf] %vm520, %v495
      %529 = vst.msk [vmem:[%s220 + $0x20] sm:$0xf] %vm520, %v496
      %530 = vst.msk [vmem:[%s220 + $0x24] sm:$0xf] %vm520, %v497
      %531 = vst.msk [vmem:[%s220 + $0x28] sm:$0xf] %vm520, %v498
      %532 = vst.msk [vmem:[%s220 + $0x2c] sm:$0xf] %vm520, %v499
      %533 = vst.msk [vmem:[%s220 + $0x30] sm:$0xf] %vm520, %v500
      %534 = vst.msk [vmem:[%s220 + $0x34] sm:$0xf] %vm520, %v501
      %535 = vst.msk [vmem:[%s220 + $0x38] sm:$0xf] %vm520, %v502
      %536 = vst.msk [vmem:[%s220 + $0x3c] sm:$0xf] %vm520, %v503
      %537 = vst.msk [vmem:[%s220 + $0x40] sm:$0xf] %vm520, %v504
      %538 = vst.msk [vmem:[%s220 + $0x44] sm:$0xf] %vm520, %v505
      %539 = vst.msk [vmem:[%s220 + $0x48] sm:$0xf] %vm520, %v506
      %540 = vst.msk [vmem:[%s220 + $0x4c] sm:$0xf] %vm520, %v507
      %541 = vst.msk [vmem:[%s220 + $0x50] sm:$0xf] %vm520, %v508
      %542 = vst.msk [vmem:[%s220 + $0x54] sm:$0xf] %vm520, %v509
      %543 = vst.msk [vmem:[%s220 + $0x58] sm:$0xf] %vm520, %v510
      %544 = vst.msk [vmem:[%s220 + $0x5c] sm:$0xf] %vm520, %v511
      %545 = vst.msk [vmem:[%s220 + $0x60] sm:$0xf] %vm520, %v512
      %546 = vst.msk [vmem:[%s220 + $0x64] sm:$0xf] %vm520, %v513
      %547 = vst.msk [vmem:[%s220 + $0x68] sm:$0xf] %vm520, %v514
      %548 = vst.msk [vmem:[%s220 + $0x6c] sm:$0xf] %vm520, %v515
      %549 = vst.msk [vmem:[%s220 + $0x70] sm:$0xf] %vm520, %v516
      %550 = vst.msk [vmem:[%s220 + $0x74] sm:$0xf] %vm520, %v517
      %551 = vst.msk [vmem:[%s220 + $0x78] sm:$0xf] %vm520, %v518
      %552 = vst.msk [vmem:[%s220 + $0x7c] sm:$0xf] %vm520, %v519
      %v553 = vunpack.c.l.bf16 %v488
      %v554 = vunpack.c.l.bf16 %v489
      %v555 = vunpack.c.l.bf16 %v490
      %v556 = vunpack.c.l.bf16 %v491
      %v557 = vunpack.c.l.bf16 %v492
      %v558 = vunpack.c.l.bf16 %v493
      %v559 = vunpack.c.l.bf16 %v494
      %v560 = vunpack.c.l.bf16 %v495
      %v561 = vunpack.c.l.bf16 %v496
      %v562 = vunpack.c.l.bf16 %v497
      %v563 = vunpack.c.l.bf16 %v498
      %v564 = vunpack.c.l.bf16 %v499
      %v565 = vunpack.c.l.bf16 %v500
      %v566 = vunpack.c.l.bf16 %v501
      %v567 = vunpack.c.l.bf16 %v502
      %v568 = vunpack.c.l.bf16 %v503
      %v569 = vunpack.c.l.bf16 %v504
      %v570 = vunpack.c.l.bf16 %v505
      %v571 = vunpack.c.l.bf16 %v506
      %v572 = vunpack.c.l.bf16 %v507
      %v573 = vunpack.c.l.bf16 %v508
      %v574 = vunpack.c.l.bf16 %v509
      %v575 = vunpack.c.l.bf16 %v510
      %v576 = vunpack.c.l.bf16 %v511
      %v577 = vunpack.c.l.bf16 %v512
      %v578 = vunpack.c.l.bf16 %v513
      %v579 = vunpack.c.l.bf16 %v514
      %v580 = vunpack.c.l.bf16 %v515
      %v581 = vunpack.c.l.bf16 %v516
      %v582 = vunpack.c.l.bf16 %v517
      %v583 = vunpack.c.l.bf16 %v518
      %v584 = vunpack.c.l.bf16 %v519
      %vm585 = vcmask 261120
      %v586 = vsel %vm585, %v553, 0.0
      %v587 = vsel %vm585, %v554, 0.0
      %v588 = vadd.f32 %v586, %v587
      %v589 = vsel %vm585, %v555, 0.0
      %v590 = vadd.f32 %v588, %v589
      %v591 = vsel %vm585, %v556, 0.0
      %v592 = vadd.f32 %v590, %v591
      %v593 = vsel %vm585, %v557, 0.0
      %v594 = vadd.f32 %v592, %v593
      %v595 = vsel %vm585, %v558, 0.0
      %v596 = vadd.f32 %v594, %v595
      %v597 = vsel %vm585, %v559, 0.0
      %v598 = vadd.f32 %v596, %v597
      %v599 = vsel %vm585, %v560, 0.0
      %v600 = vadd.f32 %v598, %v599
      %v601 = vsel %vm585, %v561, 0.0
      %v602 = vadd.f32 %v600, %v601
      %v603 = vsel %vm585, %v562, 0.0
      %v604 = vadd.f32 %v602, %v603
      %v605 = vsel %vm585, %v563, 0.0
      %v606 = vadd.f32 %v604, %v605
      %v607 = vsel %vm585, %v564, 0.0
      %v608 = vadd.f32 %v606, %v607
      %v609 = vsel %vm585, %v565, 0.0
      %v610 = vadd.f32 %v608, %v609
      %v611 = vsel %vm585, %v566, 0.0
      %v612 = vadd.f32 %v610, %v611
      %v613 = vsel %vm585, %v567, 0.0
      %v614 = vadd.f32 %v612, %v613
      %v615 = vsel %vm585, %v568, 0.0
      %v616 = vadd.f32 %v614, %v615
      %v617 = vsel %vm585, %v569, 0.0
      %v618 = vadd.f32 %v616, %v617
      %v619 = vsel %vm585, %v570, 0.0
      %v620 = vadd.f32 %v618, %v619
      %v621 = vsel %vm585, %v571, 0.0
      %v622 = vadd.f32 %v620, %v621
      %v623 = vsel %vm585, %v572, 0.0
      %v624 = vadd.f32 %v622, %v623
      %v625 = vsel %vm585, %v573, 0.0
      %v626 = vadd.f32 %v624, %v625
      %v627 = vsel %vm585, %v574, 0.0
      %v628 = vadd.f32 %v626, %v627
      %v629 = vsel %vm585, %v575, 0.0
      %v630 = vadd.f32 %v628, %v629
      %v631 = vsel %vm585, %v576, 0.0
      %v632 = vadd.f32 %v630, %v631
      %v633 = vsel %vm585, %v577, 0.0
      %v634 = vadd.f32 %v632, %v633
      %v635 = vsel %vm585, %v578, 0.0
      %v636 = vadd.f32 %v634, %v635
      %v637 = vsel %vm585, %v579, 0.0
      %v638 = vadd.f32 %v636, %v637
      %v639 = vsel %vm585, %v580, 0.0
      %v640 = vadd.f32 %v638, %v639
      %v641 = vsel %vm585, %v581, 0.0
      %v642 = vadd.f32 %v640, %v641
      %v643 = vsel %vm585, %v582, 0.0
      %v644 = vadd.f32 %v642, %v643
      %v645 = vsel %vm585, %v583, 0.0
      %v646 = vadd.f32 %v644, %v645
      %v647 = vsel %vm585, %v584, 0.0
      %v648 = vadd.f32 %v646, %v647
      %v649 = vrot.slane %v648, 4
      %v650 = vadd.f32 %v648, %v649
      %v651 = vrot.slane %v650, 2
      %v652 = vadd.f32 %v650, %v651
      %v653 = vrot.slane %v652, 1
      %v654 = vadd.f32 %v652, %v653
      %v655 = vmul.f32 %v553, %v553
      %v656 = vmul.f32 %v554, %v554
      %v657 = vmul.f32 %v555, %v555
      %v658 = vmul.f32 %v556, %v556
      %v659 = vmul.f32 %v557, %v557
      %v660 = vmul.f32 %v558, %v558
      %v661 = vmul.f32 %v559, %v559
      %v662 = vmul.f32 %v560, %v560
      %v663 = vmul.f32 %v561, %v561
      %v664 = vmul.f32 %v562, %v562
      %v665 = vmul.f32 %v563, %v563
      %v666 = vmul.f32 %v564, %v564
      %v667 = vmul.f32 %v565, %v565
      %v668 = vmul.f32 %v566, %v566
      %v669 = vmul.f32 %v567, %v567
      %v670 = vmul.f32 %v568, %v568
      %v671 = vmul.f32 %v569, %v569
      %v672 = vmul.f32 %v570, %v570
      %v673 = vmul.f32 %v571, %v571
      %v674 = vmul.f32 %v572, %v572
      %v675 = vmul.f32 %v573, %v573
      %v676 = vmul.f32 %v574, %v574
      %v677 = vmul.f32 %v575, %v575
      %v678 = vmul.f32 %v576, %v576
      %v679 = vmul.f32 %v577, %v577
      %v680 = vmul.f32 %v578, %v578
      %v681 = vmul.f32 %v579, %v579
      %v682 = vmul.f32 %v580, %v580
      %v683 = vmul.f32 %v581, %v581
      %v684 = vmul.f32 %v582, %v582
      %v685 = vmul.f32 %v583, %v583
      %v686 = vmul.f32 %v584, %v584
      %v687 = vsel %vm585, %v655, 0.0
      %v688 = vsel %vm585, %v656, 0.0
      %v689 = vadd.f32 %v687, %v688
      %v690 = vsel %vm585, %v657, 0.0
      %v691 = vadd.f32 %v689, %v690
      %v692 = vsel %vm585, %v658, 0.0
      %v693 = vadd.f32 %v691, %v692
      %v694 = vsel %vm585, %v659, 0.0
      %v695 = vadd.f32 %v693, %v694
      %v696 = vsel %vm585, %v660, 0.0
      %v697 = vadd.f32 %v695, %v696
      %v698 = vsel %vm585, %v661, 0.0
      %v699 = vadd.f32 %v697, %v698
      %v700 = vsel %vm585, %v662, 0.0
      %v701 = vadd.f32 %v699, %v700
      %v702 = vsel %vm585, %v663, 0.0
      %v703 = vadd.f32 %v701, %v702
      %v704 = vsel %vm585, %v664, 0.0
      %v705 = vadd.f32 %v703, %v704
      %v706 = vsel %vm585, %v665, 0.0
      %v707 = vadd.f32 %v705, %v706
      %v708 = vsel %vm585, %v666, 0.0
      %v709 = vadd.f32 %v707, %v708
      %v710 = vsel %vm585, %v667, 0.0
      %v711 = vadd.f32 %v709, %v710
      %v712 = vsel %vm585, %v668, 0.0
      %v713 = vadd.f32 %v711, %v712
      %v714 = vsel %vm585, %v669, 0.0
      %v715 = vadd.f32 %v713, %v714
      %v716 = vsel %vm585, %v670, 0.0
      %v717 = vadd.f32 %v715, %v716
      %v718 = vsel %vm585, %v671, 0.0
      %v719 = vadd.f32 %v717, %v718
      %v720 = vsel %vm585, %v672, 0.0
      %v721 = vadd.f32 %v719, %v720
      %v722 = vsel %vm585, %v673, 0.0
      %v723 = vadd.f32 %v721, %v722
      %v724 = vsel %vm585, %v674, 0.0
      %v725 = vadd.f32 %v723, %v724
      %v726 = vsel %vm585, %v675, 0.0
      %v727 = vadd.f32 %v725, %v726
      %v728 = vsel %vm585, %v676, 0.0
      %v729 = vadd.f32 %v727, %v728
      %v730 = vsel %vm585, %v677, 0.0
      %v731 = vadd.f32 %v729, %v730
      %v732 = vsel %vm585, %v678, 0.0
      %v733 = vadd.f32 %v731, %v732
      %v734 = vsel %vm585, %v679, 0.0
      %v735 = vadd.f32 %v733, %v734
      %v736 = vsel %vm585, %v680, 0.0
      %v737 = vadd.f32 %v735, %v736
      %v738 = vsel %vm585, %v681, 0.0
      %v739 = vadd.f32 %v737, %v738
      %v740 = vsel %vm585, %v682, 0.0
      %v741 = vadd.f32 %v739, %v740
      %v742 = vsel %vm585, %v683, 0.0
      %v743 = vadd.f32 %v741, %v742
      %v744 = vsel %vm585, %v684, 0.0
      %v745 = vadd.f32 %v743, %v744
      %v746 = vsel %vm585, %v685, 0.0
      %v747 = vadd.f32 %v745, %v746
      %v748 = vsel %vm585, %v686, 0.0
      %v749 = vadd.f32 %v747, %v748
      %v750 = vrot.slane %v749, 4
      %v751 = vadd.f32 %v749, %v750
      %v752 = vrot.slane %v751, 2
      %v753 = vadd.f32 %v751, %v752
      %v754 = vrot.slane %v753, 1
      %v755 = vadd.f32 %v753, %v754
      %vm756 = vcmask 1040384
      %v757 = vsel %vm756, %v654, %v755
      %vm758 = vcmask 254976
      %759 = vst.msk [vmem:[%s228] sm:$0x3] %vm758, %v757
      %s760 = smul.u32 32, %s20
      %p761 = scmp.lt.s32.totalorder %s19, 1
      %s762 = scalar_select %p761, %s19, 1
      %p763 = scmp.lt.s32.totalorder %s760, 31
      %s764 = scalar_select %p763, %s760, 31
      %s765 = smul.addr %s762, 32
      %s766 = sadd.s32 %s764, %s765
      %s767 = smul.addr %s766, 4
      %s768 = scalar_lea.vmem %s2, %s767
      %p769 = scmp.lt.s32.totalorder %s19, 1
      %s770 = scalar_select %p769, %s19, 1
      %p771 = scmp.lt.s32.totalorder %s20, 0
      %s772 = scalar_select %p771, %s20, 0
      %s773 = sadd.s32 %s772, %s770
      %s774 = smul.addr %s773, 2
      %s775 = scalar_lea.vmem %s3, %s774
      // Predicated region
      $region29: #{deconv2d_forward.2} parent=27 // pred_check
        %p776 = pneg %p96
      $region30: #{deconv2d_forward.2} parent=27 // pred_check_branch
        %778 = sbr.rel (%p776) target = $region32
      $region31: #{deconv2d_forward.2} parent=27 // pred_region
        %s779 = smul.u32 32, %s20
      $region32: #{deconv2d_forward.2} parent=27 // pred_fallthru
        _
      // Predicated region
      $region33: #{deconv2d_forward.2} parent=27 // pred_check
        %p780 = pneg %p124
      $region34: #{deconv2d_forward.2} parent=27 // pred_check_branch
        %782 = sbr.rel (%p780) target = $region36
      $region35: #{deconv2d_forward.2} parent=27 // pred_region
        _
      $region36: #{deconv2d_forward.2} parent=27 // pred_fallthru
        _
    $region28: #{deconv2d_forward.2} parent=5 // pred_fallthru
      _
    %p783 = scmp.le.s32.totalorder 2, %s10
    // Predicated region
    $region37: #{deconv2d_forward.2} parent=5 // pred_check
      %p784 = pneg %p783
    $region38: #{deconv2d_forward.2} parent=5 // pred_check_branch
      %786 = sbr.rel (%p784) target = $region40
    $region39: #{deconv2d_forward.2} parent=5 // pred_region
      %s787 = ssub.s32 %s10, 2
      // Predicated region
      $region41: #{deconv2d_forward.2} parent=39 // pred_check
        %p788 = pneg %p102
      $region42: #{deconv2d_forward.2} parent=39 // pred_check_branch
        %790 = sbr.rel (%p788) target = $region44
      $region43: #{deconv2d_forward.2} parent=39 // pred_region
        %s791 = smul.u32 32, %s22
        %p792 = scmp.lt.s32.totalorder %s21, 1
        %s793 = scalar_select %p792, %s21, 1
        %p794 = scmp.lt.s32.totalorder %s791, 31
        %s795 = scalar_select %p794, %s791, 31
        %s796 = smul.addr %s793, 32
        %s797 = sadd.s32 %s795, %s796
        %s798 = smul.addr %s797, 4
        %s799 = scalar_lea.vmem %s2, %s798
      $region44: #{deconv2d_forward.2} parent=39 // pred_fallthru
        _
      // Predicated region
      $region45: #{deconv2d_forward.2} parent=39 // pred_check
        %p800 = pneg %p130
      $region46: #{deconv2d_forward.2} parent=39 // pred_check_branch
        %802 = sbr.rel (%p800) target = $region48
      $region47: #{deconv2d_forward.2} parent=39 // pred_region
        %p803 = scmp.lt.s32.totalorder %s21, 1
        %s804 = scalar_select %p803, %s21, 1
        %p805 = scmp.lt.s32.totalorder %s22, 0
        %s806 = scalar_select %p805, %s22, 0
        %s807 = sadd.s32 %s806, %s804
        %s808 = smul.addr %s807, 2
        %s809 = scalar_lea.vmem %s3, %s808
      $region48: #{deconv2d_forward.2} parent=39 // pred_fallthru
        _
    $region40: #{deconv2d_forward.2} parent=5 // pred_fallthru
      _
  $region6: #{deconv2d_forward.2} parent=0 // loop_footer
    %s14 = sadd.s32 1, %s10
  $region7: #{deconv2d_forward.2} parent=0 // loop_footer_branch
    %9 = sbr.rel target = $region3
  $region8: #{deconv2d_forward.2} parent=0 // loop_exit
    _

// kernel: tile.18
$region0: #{tile.18}
  #allocation0 [shape = 's32[1]{0}', space=sflag, size = 0x4, scoped, tag = 'scoped memory for tile.18']
  %s0 = inlined_call_operand.vmem [shape: f32[8], index: 0, kind: input, shape index: {}]
  %s1 = inlined_call_operand.vmem [shape: f32[2,8], index: 1, kind: output, shape index: {}]
  // Predicated region
  $region2: #{tile.18} parent=0 // pred_check
    _
  $region3: #{tile.18} parent=0 // pred_check_branch
    %3 = sbr.rel (0) target = $region5
  $region4: #{tile.18} parent=0 // pred_region
    _
  $region5: #{tile.18} parent=0 // pred_fallthru
    _
  %v4 = vld [vmem:[%s0] ss:$0 sm:$0xff]
  %5 = vst [vmem:[%s1] sm:$0x3] %v4

// kernel: deconv2d_forward.3
$region0: #{deconv2d_forward.3}
  #allocation0 [shape = 'u32[]', space=smem, size = 0x4, offset = 0x4, fixed_abs, tag = 'smem constant byte address 0x4 - core index']
  #allocation1 [shape = 'u32[72,128]{1,0:T(1,128)}', space=vmem, size = 0x9000, scoped, tag = 'internal scratch']
  %s0 = inlined_call_operand.vmem [shape: bf16[16,32,32], index: 0, kind: input, shape index: {}]
  %s1 = inlined_call_operand.vmem [shape: f32[16,1,32], index: 1, kind: input, shape index: {}]
  %s2 = inlined_call_operand.vmem [shape: f32[16,1,32], index: 2, kind: input, shape index: {}]
  %s3 = inlined_call_operand.hbm [shape: f32[16,32,32], index: 3, kind: output, shape index: {}]
  %s4 = sld [smem:[#allocation0]]
  $region45: #{deconv2d_forward.3} parent=0
    _
  %s6 = ssub.s32 1, %s4
  %s7 = scalar_select 0, %s6, %s4
  $region1: #{deconv2d_forward.3} parent=0
    #allocation2 [shape = 'u8[32768]{0}', space=vmem, size = 0x8000, scoped, tag = 'output window, operand 0']
    #allocation3 [shape = 's32[2]{0}', space=sflag, size = 0x8, scoped, tag = 'scoped memory for deconv2d_forward.3']
    %8 = vsyncpa [#allocation3], 0
    %s9 = scalar_lea.sflag [#allocation3], 1
    %10 = vsyncpa %s9, 0
    loop: start=0, step=1, limit=18
    $region2: #{deconv2d_forward.3} parent=1 // loop_pre_header
      _
    $region3: #{deconv2d_forward.3} parent=1 // loop_header
      %s12 = sphi 0, %s16
      %p13 = scmp.ge.s32.totalorder %s12, 18
      %s19 = sphi 0, %s31
      %s20 = sphi 0, %s27
      %s21 = sphi 0, %s19
      %s22 = sphi 0, %s20
      %s23 = sphi 0, %s21
      %s24 = sphi 0, %s22
      %s36 = sphi 0, %s38
      %s39 = sphi 0, %s36
      %s40 = sphi 0, %s39
      %s56 = sphi 0, %s40
      %s62 = sphi 0, %s64
      %s65 = sphi 0, %s62
      %s66 = sphi 0, %s65
      %s82 = sphi 0, %s66
      %s88 = sphi 0, %s90
      %s91 = sphi 0, %s88
      %s92 = sphi 0, %s91
      %s108 = sphi 0, %s92
      %s116 = sphi 0, %s118
      %s119 = sphi 0, %s116
      %s120 = sphi 0, %s119
      %s136 = sphi 0, %s120
    $region4: #{deconv2d_forward.3} parent=1 // loop_header_branch
      %15 = sbr.rel (%p13) target = $region8
    $region5: #{deconv2d_forward.3} parent=1 // loop_body
      %s17 = ssub.s32 %s12, 1
      %s18 = ssub.s32 %s12, 2
      %s25 = sadd.s32 1, %s20
      %p26 = scmp.ge.s32.totalorder %s25, 1
      %s27 = scalar_select %p26, 0, %s25
      %s28 = sadd.s32 1, %s19
      %s29 = scalar_select %p26, %s28, %s19
      %p30 = scmp.ge.s32.totalorder %s29, 16
      %s31 = scalar_select %p30, 0, %s29
      %s32 = ssub.s32 %s19, %s31
      %s33 = ssub.s32 %s20, %s27
      %s34 = sor.u32 %s32, %s33
      %p35 = scmp.eq.s32.totalorder %s34, 0
      %s37 = sadd.s32 %s36, 1
      %s38 = scalar_select %p35, %s36, %s37
      %p41 = pneg %p35
      %p42 = scmp.eq.s32.totalorder %s12, 15
      %p43 = por %p41, %p42
      %p44 = scmp.ne.s32.totalorder %s36, %s39
      %p45 = scmp.eq.s32.totalorder %s12, 0
      %p46 = por %p44, %p45
      %p47 = scmp.ne.s32.totalorder %s36, %s39
      %p48 = scmp.eq.s32.totalorder %s17, 15
      %p49 = por %p47, %p48
      %p50 = scmp.ne.s32.totalorder %s39, %s40
      %p51 = scmp.eq.s32.totalorder %s17, 0
      %p52 = por %p50, %p51
      %p53 = scmp.ne.s32.totalorder %s39, %s40
      %p54 = scmp.eq.s32.totalorder %s18, 15
      %p55 = por %p53, %p54
      %p57 = scmp.ne.s32.totalorder %s40, %s56
      %p58 = scmp.eq.s32.totalorder %s18, 0
      %p59 = por %p57, %p58
      %s60 = ssub.s32 %s19, %s31
      %p61 = scmp.eq.s32.totalorder %s60, 0
      %s63 = sadd.s32 %s62, 1
      %s64 = scalar_select %p61, %s62, %s63
      %p67 = pneg %p61
      %p68 = scmp.eq.s32.totalorder %s12, 15
      %p69 = por %p67, %p68
      %p70 = scmp.ne.s32.totalorder %s62, %s65
      %p71 = scmp.eq.s32.totalorder %s12, 0
      %p72 = por %p70, %p71
      %p73 = scmp.ne.s32.totalorder %s62, %s65
      %p74 = scmp.eq.s32.totalorder %s17, 15
      %p75 = por %p73, %p74
      %p76 = scmp.ne.s32.totalorder %s65, %s66
      %p77 = scmp.eq.s32.totalorder %s17, 0
      %p78 = por %p76, %p77
      %p79 = scmp.ne.s32.totalorder %s65, %s66
      %p80 = scmp.eq.s32.totalorder %s18, 15
      %p81 = por %p79, %p80
      %p83 = scmp.ne.s32.totalorder %s66, %s82
      %p84 = scmp.eq.s32.totalorder %s18, 0
      %p85 = por %p83, %p84
      %s86 = ssub.s32 %s19, %s31
      %p87 = scmp.eq.s32.totalorder %s86, 0
      %s89 = sadd.s32 %s88, 1
      %s90 = scalar_select %p87, %s88, %s89
      %p93 = pneg %p87
      %p94 = scmp.eq.s32.totalorder %s12, 15
      %p95 = por %p93, %p94
      %p96 = scmp.ne.s32.totalorder %s88, %s91
      %p97 = scmp.eq.s32.totalorder %s12, 0
      %p98 = por %p96, %p97
      %p99 = scmp.ne.s32.totalorder %s88, %s91
      %p100 = scmp.eq.s32.totalorder %s17, 15
      %p101 = por %p99, %p100
      %p102 = scmp.ne.s32.totalorder %s91, %s92
      %p103 = scmp.eq.s32.totalorder %s17, 0
      %p104 = por %p102, %p103
      %p105 = scmp.ne.s32.totalorder %s91, %s92
      %p106 = scmp.eq.s32.totalorder %s18, 15
      %p107 = por %p105, %p106
      %p109 = scmp.ne.s32.totalorder %s92, %s108
      %p110 = scmp.eq.s32.totalorder %s18, 0
      %p111 = por %p109, %p110
      %s112 = ssub.s32 %s19, %s31
      %s113 = ssub.s32 %s20, %s27
      %s114 = sor.u32 %s112, %s113
      %p115 = scmp.eq.s32.totalorder %s114, 0
      %s117 = sadd.s32 %s116, 1
      %s118 = scalar_select %p115, %s116, %s117
      %p121 = pneg %p115
      %p122 = scmp.eq.s32.totalorder %s12, 15
      %p123 = por %p121, %p122
      %p124 = scmp.ne.s32.totalorder %s116, %s119
      %p125 = scmp.eq.s32.totalorder %s12, 0
      %p126 = por %p124, %p125
      %p127 = scmp.ne.s32.totalorder %s116, %s119
      %p128 = scmp.eq.s32.totalorder %s17, 15
      %p129 = por %p127, %p128
      %p130 = scmp.ne.s32.totalorder %s119, %s120
      %p131 = scmp.eq.s32.totalorder %s17, 0
      %p132 = por %p130, %p131
      %p133 = scmp.ne.s32.totalorder %s119, %s120
      %p134 = scmp.eq.s32.totalorder %s18, 15
      %p135 = por %p133, %p134
      %p137 = scmp.ne.s32.totalorder %s120, %s136
      %p138 = scmp.eq.s32.totalorder %s18, 0
      %p139 = por %p137, %p138
      %p140 = scmp.le.s32.totalorder 1, %s12
      %p141 = scmp.lt.s32.totalorder %s12, 17
      %p142 = pnand %p140, %p141
      %p143 = pneg %p142
      // Predicated region
      $region9: #{deconv2d_forward.3} parent=5 // pred_check
        _
      $region10: #{deconv2d_forward.3} parent=5 // pred_check_branch
        %145 = sbr.rel (%p142) target = $region12
      $region11: #{deconv2d_forward.3} parent=5 // pred_region
        %s146 = ssub.s32 %s12, 1
      $region12: #{deconv2d_forward.3} parent=5 // pred_fallthru
        _
      %p147 = scmp.lt.s32.totalorder %s12, 16
      // Predicated region
      $region13: #{deconv2d_forward.3} parent=5 // pred_check
        %p148 = pneg %p147
      $region14: #{deconv2d_forward.3} parent=5 // pred_check_branch
        %150 = sbr.rel (%p148) target = $region16
      $region15: #{deconv2d_forward.3} parent=5 // pred_region
        // Predicated region
        $region17: #{deconv2d_forward.3} parent=15 // pred_check
          %p151 = pneg %p46
        $region18: #{deconv2d_forward.3} parent=15 // pred_check_branch
          %153 = sbr.rel (%p151) target = $region20
        $region19: #{deconv2d_forward.3} parent=15 // pred_region
          %s154 = smul.u32 4, %s20
          %p155 = scmp.lt.s32.totalorder %s19, 15
          %s156 = scalar_select %p155, %s19, 15
          %p157 = scmp.lt.s32.totalorder %s154, 3
          %s158 = scalar_select %p157, %s154, 3
          %s159 = smul.addr %s156, 4
          %s160 = sadd.s32 %s158, %s159
          %s161 = smul.addr %s160, 4
          %s162 = scalar_lea.vmem %s0, %s161
          %s163 = smul.u32 4, %s20
        $region20: #{deconv2d_forward.3} parent=15 // pred_fallthru
          _
        // Predicated region
        $region21: #{deconv2d_forward.3} parent=15 // pred_check
          %p164 = pneg %p72
        $region22: #{deconv2d_forward.3} parent=15 // pred_check_branch
          %166 = sbr.rel (%p164) target = $region24
        $region23: #{deconv2d_forward.3} parent=15 // pred_region
          %p167 = scmp.lt.s32.totalorder %s19, 15
          %s168 = scalar_select %p167, %s19, 15
          %s169 = scalar_lea.vmem %s1, %s168
        $region24: #{deconv2d_forward.3} parent=15 // pred_fallthru
          _
        // Predicated region
        $region25: #{deconv2d_forward.3} parent=15 // pred_check
          %p170 = pneg %p98
        $region26: #{deconv2d_forward.3} parent=15 // pred_check_branch
          %172 = sbr.rel (%p170) target = $region28
        $region27: #{deconv2d_forward.3} parent=15 // pred_region
          %p173 = scmp.lt.s32.totalorder %s19, 15
          %s174 = scalar_select %p173, %s19, 15
          %s175 = scalar_lea.vmem %s2, %s174
        $region28: #{deconv2d_forward.3} parent=15 // pred_fallthru
          _
      $region16: #{deconv2d_forward.3} parent=5 // pred_fallthru
        _
      %p176 = scmp.le.s32.totalorder 1, %s12
      %p177 = scmp.lt.s32.totalorder %s12, 17
      %p178 = pnand %p176, %p177
      %p179 = pneg %p178
      // Predicated region
      $region29: #{deconv2d_forward.3} parent=5 // pred_check
        _
      $region30: #{deconv2d_forward.3} parent=5 // pred_check_branch
        %181 = sbr.rel (%p178) target = $region32
      $region31: #{deconv2d_forward.3} parent=5 // pred_region
        %s182 = ssub.s32 %s12, 1
        %s183 = smul.u32 4, %s22
        %p184 = scmp.lt.s32.totalorder %s21, 15
        %s185 = scalar_select %p184, %s21, 15
        %p186 = scmp.lt.s32.totalorder %s183, 3
        %s187 = scalar_select %p186, %s183, 3
        %s188 = smul.addr %s185, 4
        %s189 = sadd.s32 %s187, %s188
        %s190 = smul.addr %s189, 4
        %s191 = scalar_lea.vmem %s0, %s190
        %p192 = pneg %p52
        %p193 = pneg %p49
        %p194 = scmp.lt.s32.totalorder %s21, 15
        %s195 = scalar_select %p194, %s21, 15
        %s196 = scalar_lea.vmem %s1, %s195
        %p197 = pneg %p78
        %p198 = pneg %p75
        %p199 = scmp.lt.s32.totalorder %s21, 15
        %s200 = scalar_select %p199, %s21, 15
        %s201 = scalar_lea.vmem %s2, %s200
        %p202 = pneg %p104
        %p203 = pneg %p101
        %p204 = pneg %p132
        %p205 = pneg %p129
        %s206 = sand.u32 %s119, 1
        %s207 = scalar_lea.sflag [#allocation3], %s206
        %s208 = sand.u32 %s119, 1
        %s209 = smul.addr %s208, 32
        %s210 = scalar_lea.vmem [#allocation2], %s209
        %s211 = smul.u32 4, %s22
        %p212 = scmp.lt.s32.totalorder %s21, 15
        %s213 = scalar_select %p212, %s21, 15
        %p214 = scmp.lt.s32.totalorder %s211, 3
        %s215 = scalar_select %p214, %s211, 3
        %s216 = smul.addr %s213, 4
        %s217 = sadd.s32 %s215, %s216
        %s218 = smul.addr %s217, 4
        %s219 = scalar_lea.vmem %s0, %s218
        %s220 = smul.u32 4, %s22
        %p221 = scmp.lt.s32.totalorder %s21, 15
        %s222 = scalar_select %p221, %s21, 15
        %s223 = scalar_lea.vmem %s1, %s222
        %p224 = scmp.lt.s32.totalorder %s21, 15
        %s225 = scalar_select %p224, %s21, 15
        %s226 = scalar_lea.vmem %s2, %s225
        %s227 = smul.u32 4, %s22
        %v228 = vld [vmem:[%s219] sm:$0xf]
        %v229 = vld [vmem:[%s219 + $0x4] sm:$0xf]
        %v230 = vld [vmem:[%s219 + $0x8] sm:$0xf]
        %v231 = vld [vmem:[%s219 + $0xc] sm:$0xf]
        %v232 = vunpack.c.l.bf16 %v228
        %v233 = vunpack.c.l.bf16 %v229
        %v234 = vunpack.c.l.bf16 %v230
        %v235 = vunpack.c.l.bf16 %v231
        %v236 = vld [vmem:[%s223] sm:$0x1]
        %v238 = vperm.slane %v236, 0
        %v240 = vmul.f32 %v232, %v238
        %v241 = vmul.f32 %v233, %v238
        %v242 = vmul.f32 %v234, %v238
        %v243 = vmul.f32 %v235, %v238
        %v244 = vld [vmem:[%s226] sm:$0x1]
        %v246 = vperm.slane %v244, 0
        %v248 = vadd.f32 %v240, %v246
        %v249 = vadd.f32 %v241, %v246
        %v250 = vadd.f32 %v242, %v246
        %v251 = vadd.f32 %v243, %v246
        %v252 = vmax.f32 %v248, 0.0
        %v253 = vmax.f32 %v249, 0.0
        %v254 = vmax.f32 %v250, 0.0
        %v255 = vmax.f32 %v251, 0.0
        %vm256 = vcmask 261120
        %257 = vst.msk [vmem:[%s210] sm:$0xff] %vm256, %v252
        %258 = vst.msk [vmem:[%s210 + $0x8] sm:$0xff] %vm256, %v253
        %259 = vst.msk [vmem:[%s210 + $0x10] sm:$0xff] %vm256, %v254
        %260 = vst.msk [vmem:[%s210 + $0x18] sm:$0xff] %vm256, %v255
        %s261 = sand.u32 %s119, 1
        %s262 = scalar_lea.sflag [#allocation3], %s261
        %s263 = sand.u32 %s119, 1
        %s264 = smul.addr %s263, 32
        %s265 = scalar_lea.vmem [#allocation2], %s264
        // Predicated region
        $region33: #{deconv2d_forward.3} parent=31 // pred_check
          %p266 = pneg %p129
        $region34: #{deconv2d_forward.3} parent=31 // pred_check_branch
          %268 = sbr.rel (%p266) target = $region36
        $region35: #{deconv2d_forward.3} parent=31 // pred_region
          %s269 = smul.u32 4, %s22
          %271 = vsyncadd %s262, 0
          %s272 = smul.addr %s21, 4
          %s273 = sadd.s32 %s269, %s272
          %s274 = smul.addr %s273, 8
          %s275 = scalar_lea.hbm %s3, %s274
          %s276 = sshll.u32 %s265, 4
          %s277 = int_to_ptr.vmem [resolvable:$true] %s276
          %s278 = sshll.u32 %s275, 4
          %s279 = int_to_ptr.hbm [resolvable:$true] %s278
          %284 = dma.vmem_to_hbm [thread:$0]  %s277, 512, %s279, %s262, 128, 128, 8
        $region36: #{deconv2d_forward.3} parent=31 // pred_fallthru
          _
      $region32: #{deconv2d_forward.3} parent=5 // pred_fallthru
        _
      %p285 = scmp.le.s32.totalorder 2, %s12
      // Predicated region
      $region37: #{deconv2d_forward.3} parent=5 // pred_check
        %p286 = pneg %p285
      $region38: #{deconv2d_forward.3} parent=5 // pred_check_branch
        %288 = sbr.rel (%p286) target = $region40
      $region39: #{deconv2d_forward.3} parent=5 // pred_region
        %s289 = ssub.s32 %s12, 2
        // Predicated region
        $region41: #{deconv2d_forward.3} parent=39 // pred_check
          %p290 = pneg %p135
        $region42: #{deconv2d_forward.3} parent=39 // pred_check_branch
          %292 = sbr.rel (%p290) target = $region44
        $region43: #{deconv2d_forward.3} parent=39 // pred_region
          %s293 = sand.u32 %s120, 1
          %s294 = scalar_lea.sflag [#allocation3], %s293
          %s295 = sand.u32 %s120, 1
          %s296 = smul.addr %s295, 32
          %s297 = scalar_lea.vmem [#allocation2], %s296
          %299 = dma.done %s294, 512
        $region44: #{deconv2d_forward.3} parent=39 // pred_fallthru
          _
      $region40: #{deconv2d_forward.3} parent=5 // pred_fallthru
        _
    $region6: #{deconv2d_forward.3} parent=1 // loop_footer
      %s16 = sadd.s32 1, %s12
    $region7: #{deconv2d_forward.3} parent=1 // loop_footer_branch
      %11 = sbr.rel target = $region3
    $region8: #{deconv2d_forward.3} parent=1 // loop_exit
      _
    %300 = vsyncpa [#allocation3], 1
    %s301 = scalar_lea.sflag [#allocation3], 1
    %302 = vsyncpa %s301, 1

</llo_original>
